<compile_context>
chip_gen: v7x
topology: tpu7x:2x2x1
jax: 0.10.0
libtpu: 0.0.40
codegen_flags: <defaults>
</compile_context>

<pallas_src>
import functools

import jax
import jax.numpy as jnp
from jax.experimental import pallas as pl
from jax.experimental.pallas import tpu as pltpu

MAX_ATOMIC_NUM = 100  # as in CDVAE / crystalgrw
_LANE = 128


def _round_up(x, m):
    return -(-x // m) * m


# --------------------------------------------------------------------------
# Parameter construction (deterministic, mimics nn.Linear default init)
# --------------------------------------------------------------------------
def make_mlp_params(key, in_dim, hidden_dim, fc_num_layers, out_dim):
    """build_mlp(in_dim, hidden_dim, fc_num_layers, out_dim) parameters.

    Returns a list of (W, b) with W: (d_in, d_out) [i.e. transposed vs torch],
    b: (1, d_out), all float32.  Structure: Linear+ReLU, (fc_num_layers-1) x
    (Linear+ReLU), Linear.
    """
    dims = [in_dim] + [hidden_dim] * fc_num_layers + [out_dim]
    params = []
    for d_in, d_out in zip(dims[:-1], dims[1:]):
        key, kw, kb = jax.random.split(key, 3)
        bound = 1.0 / (d_in ** 0.5)
        W = jax.random.uniform(kw, (d_in, d_out), jnp.float32, -bound, bound)
        b = jax.random.uniform(kb, (1, d_out), jnp.float32, -bound, bound)
        params.append((W, b))
    return params


def _prepare_head(params, w_dtype=jnp.bfloat16):
    """Pad the final layer to a lane multiple of 128 and cast W to bf16."""
    n = len(params)
    out_dim = params[-1][0].shape[1]
    out_pad = _round_up(out_dim, _LANE)
    prepped = []
    for li, (W, b) in enumerate(params):
        if li == n - 1 and out_pad != out_dim:
            W = jnp.pad(W, ((0, 0), (0, out_pad - out_dim)))
            b = jnp.pad(b, ((0, 0), (0, out_pad - out_dim)))
        prepped.append((W.astype(w_dtype), b.astype(jnp.float32)))
    return prepped, out_dim, out_pad


def _choose_tile_rows(n, max_tile=512):
    """Large, sublane-aligned row tiles; split small inputs into >=2 tiles
    when there is enough work so both v7x TensorCores get a grid step."""
    n8 = _round_up(max(n, 1), 8)
    if n8 > 2 * max_tile:
        return max_tile
    if n8 >= 256:
        return _round_up(-(-n8 // 2), 8)
    return n8


# --------------------------------------------------------------------------
# Fused multi-head MLP kernel: every linear layer of every head in one body.
# --------------------------------------------------------------------------
def _fused_heads_kernel(layer_counts, x_ref, *refs):
    total_param_refs = 2 * sum(layer_counts)
    param_refs = refs[:total_param_refs]
    out_refs = refs[total_param_refs:]

    x = x_ref[...].astype(jnp.float32)

    off = 0
    for head_idx, n_linear in enumerate(layer_counts):
        wb = param_refs[off: off + 2 * n_linear]
        off += 2 * n_linear
        h = x
        for l in range(n_linear):
            W = wb[2 * l][...]                  # bf16, resident in VMEM
            b = wb[2 * l + 1][...]              # f32
            # bf16 operands on the MXU, f32 accumulation / epilogue.
            h = jnp.dot(h.astype(W.dtype), W,
                        preferred_element_type=jnp.float32)
            h = h + b
            if l < n_linear - 1:                # ReLU after all but last layer
                h = jnp.maximum(h, 0.0)
        out_refs[head_idx][...] = h.astype(out_refs[head_idx].dtype)


def fused_mlp_heads(x, heads_params, tile_rows=None):
    """Run several MLP heads on the same input x in ONE pallas_call.

    x: (N, in_dim) float32.  heads_params: list of [(W, b), ...] (f32,
    unpadded).  Returns a list of (N, out_dim_i) float32 arrays.
    """
    N, in_dim = x.shape
    prepped = [_prepare_head(p) for p in heads_params]

    if tile_rows is None:
        tile_rows = _choose_tile_rows(N)
    n_pad = (-N) % tile_rows
    xp = jnp.pad(x, ((0, n_pad), (0, 0))) if n_pad else x
    Np = N + n_pad
    grid = (Np // tile_rows,)

    flat_args = [xp]
    in_specs = [pl.BlockSpec((tile_rows, in_dim), lambda i: (i, 0))]
    layer_counts = []
    out_shapes = []
    out_specs = []
    for padded_params, _out_dim, out_pad in prepped:
        layer_counts.append(len(padded_params))
        for W, b in padded_params:
            flat_args += [W, b]
            # Weights/biases: full-array blocks, constant index_map -> fetched
            # once and kept resident across the grid.
            in_specs += [pl.BlockSpec(W.shape, lambda i: (0, 0)),
                         pl.BlockSpec(b.shape, lambda i: (0, 0))]
        out_shapes.append(jax.ShapeDtypeStruct((Np, out_pad), x.dtype))
        out_specs.append(pl.BlockSpec((tile_rows, out_pad), lambda i: (i, 0)))

    outs = pl.pallas_call(
        functools.partial(_fused_heads_kernel, tuple(layer_counts)),
        out_shape=tuple(out_shapes),
        grid=grid,
        in_specs=in_specs,
        out_specs=tuple(out_specs),
        compiler_params=pltpu.CompilerParams(
            dimension_semantics=("parallel",)),
    )(*flat_args)
    if not isinstance(outs, (list, tuple)):
        outs = (outs,)
    return [o[:N, :out_dim] for o, (_, out_dim, _) in zip(outs, prepped)]


# --------------------------------------------------------------------------
# MLPDecodeAtoms.forward
# --------------------------------------------------------------------------
def mlp_decode_atoms_forward(z, params_num_atoms, params_composition=None,
                             gt_num_atoms=None, decode_composition=True,
                             total_num_atoms=None):
    """Mirrors MLPDecodeAtoms.forward.

    z: (B, latent_dim) float32.
    gt_num_atoms: optional int array (B,).
    total_num_atoms: optional static int = sum(repeats); when given, the
      ragged repeat is jit-friendly (no device->host sync).
    Returns (num_atoms, composition_per_atom) if decode_composition else
    num_atoms.  When gt_num_atoms is given, num_atoms is the raw logits
    (B, max_atoms+1), exactly like the PyTorch module.
    """
    heads = [params_num_atoms]
    if decode_composition:
        heads.append(params_composition)
    outs = fused_mlp_heads(z, heads)

    na_logits = outs[0]                                   # (B, max_atoms+1)
    if gt_num_atoms is None:
        num_atoms = jnp.argmax(na_logits, axis=-1)        # (B,)
    else:
        num_atoms = na_logits                             # raw logits (torch behavior)

    if not decode_composition:
        return num_atoms

    comp_unique = outs[1]                                 # (B, MAX_ATOMIC_NUM)
    repeats = gt_num_atoms if gt_num_atoms is not None else num_atoms
    # repeat_interleave on the *output* (MLP is row-wise -> identical result).
    # TODO(synk): ragged output size is data-dependent; needs a static total
    # (total_num_atoms) to stay jit-compatible, else falls back to host sync.
    if total_num_atoms is not None:
        total = int(total_num_atoms)
    else:
        total = int(jnp.sum(repeats))
    if total == 0:
        comp = jnp.zeros((0, comp_unique.shape[1]), comp_unique.dtype)
    else:
        comp = jnp.repeat(comp_unique, repeats, axis=0, total_repeat_length=total)
    return num_atoms, comp


# --------------------------------------------------------------------------
# Plain-JAX reference (same bf16-operand / f32-accumulate arithmetic)
# --------------------------------------------------------------------------
def _mlp_reference(x, params):
    h = x.astype(jnp.float32)
    n = len(params)
    for l, (W, b) in enumerate(params):
        h = jnp.dot(h.astype(jnp.bfloat16), W.astype(jnp.bfloat16),
                    preferred_element_type=jnp.float32) + b
        if l < n - 1:
            h = jnp.maximum(h, 0.0)
    return h.astype(x.dtype)


# --------------------------------------------------------------------------
# Demo / smoke test
# --------------------------------------------------------------------------
if __name__ == "__main__":
    B = 2
    latent_dim = 16
    hidden_dim = 32
    fc_num_layers = 2
    max_atoms = 20

    key = jax.random.PRNGKey(0)
    k_z, k_na, k_comp = jax.random.split(key, 3)

    z = jax.random.normal(k_z, (B, latent_dim), jnp.float32)
    params_num_atoms = make_mlp_params(k_na, latent_dim, hidden_dim,
                                       fc_num_layers, max_atoms + 1)
    params_composition = make_mlp_params(k_comp, latent_dim, hidden_dim,
                                         fc_num_layers, MAX_ATOMIC_NUM)

    # ---- Path 1: ground-truth num_atoms supplied (training path) ----
    gt_list = [3, 5]
    gt_num_atoms = jnp.array(gt_list, dtype=jnp.int32)
    na_logits, comp = mlp_decode_atoms_forward(
        z, params_num_atoms, params_composition,
        gt_num_atoms=gt_num_atoms, total_num_atoms=sum(gt_list))
    na_logits = jax.block_until_ready(na_logits)
    comp = jax.block_until_ready(comp)
    assert na_logits.shape == (B, max_atoms + 1)
    assert comp.shape == (sum(gt_list), MAX_ATOMIC_NUM)

    ref_na = _mlp_reference(z, params_num_atoms)
    ref_comp = jnp.repeat(_mlp_reference(z, params_composition), gt_num_atoms,
                          axis=0, total_repeat_length=sum(gt_list))
    assert jnp.allclose(na_logits, ref_na, rtol=2e-2, atol=2e-2)
    assert jnp.allclose(comp, ref_comp, rtol=2e-2, atol=2e-2)

    # ---- Path 2: no ground truth -> argmax of predicted logits drives repeats
    na_pred, comp_pred = mlp_decode_atoms_forward(
        z, params_num_atoms, params_composition, gt_num_atoms=None)
    na_pred = jax.block_until_ready(na_pred)
    comp_pred = jax.block_until_ready(comp_pred)
    assert na_pred.shape == (B,)
    assert comp_pred.shape == (int(jnp.sum(na_pred)), MAX_ATOMIC_NUM)

    # ---- decode_composition=False path ----
    na_only = mlp_decode_atoms_forward(z, params_num_atoms, None,
                                       decode_composition=False)
    na_only = jax.block_until_ready(na_only)
    assert na_only.shape == (B,)

    print("KERNEL_OK")
</pallas_src>

<mosaic_0001>
module attributes {stable_mosaic.version = 11 : i64} {
  func.func @_fused_heads_kernel(%arg0: i32, %arg1: memref<8x16xf32, #tpu.memory_space<vmem>>, %arg2: memref<16x32xbf16, #tpu.memory_space<vmem>>, %arg3: memref<1x32xf32, #tpu.memory_space<vmem>>, %arg4: memref<32x32xbf16, #tpu.memory_space<vmem>>, %arg5: memref<1x32xf32, #tpu.memory_space<vmem>>, %arg6: memref<32x128xbf16, #tpu.memory_space<vmem>>, %arg7: memref<1x128xf32, #tpu.memory_space<vmem>>, %arg8: memref<16x32xbf16, #tpu.memory_space<vmem>>, %arg9: memref<1x32xf32, #tpu.memory_space<vmem>>, %arg10: memref<32x32xbf16, #tpu.memory_space<vmem>>, %arg11: memref<1x32xf32, #tpu.memory_space<vmem>>, %arg12: memref<32x128xbf16, #tpu.memory_space<vmem>>, %arg13: memref<1x128xf32, #tpu.memory_space<vmem>>, %arg14: memref<8x128xf32, #tpu.memory_space<vmem>>, %arg15: memref<8x128xf32, #tpu.memory_space<vmem>>) attributes {dimension_semantics = [#tpu.dimension_semantics<parallel>], iteration_bounds = array<i64: 1>, scalar_prefetch = 0 : i64, scratch_operands = 0 : i64, tpu.core_type = #tpu.core_type<tc>, window_params = [{transform_indices = @transform_0, window_bounds = array<i64: 8, 16>}, {pipeline_mode = #tpu.pipeline_mode<synchronous>, transform_indices = @transform_1, window_bounds = array<i64: 16, 32>}, {pipeline_mode = #tpu.pipeline_mode<synchronous>, transform_indices = @transform_2, window_bounds = array<i64: 1, 32>}, {pipeline_mode = #tpu.pipeline_mode<synchronous>, transform_indices = @transform_3, window_bounds = array<i64: 32, 32>}, {pipeline_mode = #tpu.pipeline_mode<synchronous>, transform_indices = @transform_4, window_bounds = array<i64: 1, 32>}, {pipeline_mode = #tpu.pipeline_mode<synchronous>, transform_indices = @transform_5, window_bounds = array<i64: 32, 128>}, {pipeline_mode = #tpu.pipeline_mode<synchronous>, transform_indices = @transform_6, window_bounds = array<i64: 1, 128>}, {pipeline_mode = #tpu.pipeline_mode<synchronous>, transform_indices = @transform_7, window_bounds = array<i64: 16, 32>}, {pipeline_mode = #tpu.pipeline_mode<synchronous>, transform_indices = @transform_8, window_bounds = array<i64: 1, 32>}, {pipeline_mode = #tpu.pipeline_mode<synchronous>, transform_indices = @transform_9, window_bounds = array<i64: 32, 32>}, {pipeline_mode = #tpu.pipeline_mode<synchronous>, transform_indices = @transform_10, window_bounds = array<i64: 1, 32>}, {pipeline_mode = #tpu.pipeline_mode<synchronous>, transform_indices = @transform_11, window_bounds = array<i64: 32, 128>}, {pipeline_mode = #tpu.pipeline_mode<synchronous>, transform_indices = @transform_12, window_bounds = array<i64: 1, 128>}, {transform_indices = @transform_13, window_bounds = array<i64: 8, 128>}, {transform_indices = @transform_14, window_bounds = array<i64: 8, 128>}]} {
    %c0 = arith.constant 0 : index
    %c0_0 = arith.constant 0 : index
    %0 = vector.load %arg1[%c0, %c0_0] : memref<8x16xf32, #tpu.memory_space<vmem>>, vector<8x16xf32>
    %c0_1 = arith.constant 0 : index
    %c0_2 = arith.constant 0 : index
    %1 = vector.load %arg2[%c0_1, %c0_2] : memref<16x32xbf16, #tpu.memory_space<vmem>>, vector<16x32xbf16>
    %c0_3 = arith.constant 0 : index
    %c0_4 = arith.constant 0 : index
    %2 = vector.load %arg3[%c0_3, %c0_4] : memref<1x32xf32, #tpu.memory_space<vmem>>, vector<1x32xf32>
    %3 = arith.truncf %0 : vector<8x16xf32> to vector<8x16xbf16>
    %cst = arith.constant dense<0.000000e+00> : vector<8x32xf32>
    %4 = tpu.matmul %3, %1, %cst {dimension_numbers = #tpu.dot_dimension_numbers<[1], [0], [0], [1], [0, 0, 1, 1], [], []>} : vector<8x16xbf16>, vector<16x32xbf16>, vector<8x32xf32> -> vector<8x32xf32>
    %5 = vector.broadcast %2 : vector<1x32xf32> to vector<8x32xf32>
    %6 = arith.addf %4, %5 : vector<8x32xf32>
    %cst_5 = arith.constant 0.000000e+00 : f32
    %7 = vector.broadcast %cst_5 : f32 to vector<8x32xf32>
    %8 = arith.maximumf %6, %7 : vector<8x32xf32>
    %c0_6 = arith.constant 0 : index
    %c0_7 = arith.constant 0 : index
    %9 = vector.load %arg4[%c0_6, %c0_7] : memref<32x32xbf16, #tpu.memory_space<vmem>>, vector<32x32xbf16>
    %c0_8 = arith.constant 0 : index
    %c0_9 = arith.constant 0 : index
    %10 = vector.load %arg5[%c0_8, %c0_9] : memref<1x32xf32, #tpu.memory_space<vmem>>, vector<1x32xf32>
    %11 = arith.truncf %8 : vector<8x32xf32> to vector<8x32xbf16>
    %cst_10 = arith.constant dense<0.000000e+00> : vector<8x32xf32>
    %12 = tpu.matmul %11, %9, %cst_10 {dimension_numbers = #tpu.dot_dimension_numbers<[1], [0], [0], [1], [0, 0, 1, 1], [], []>} : vector<8x32xbf16>, vector<32x32xbf16>, vector<8x32xf32> -> vector<8x32xf32>
    %13 = vector.broadcast %10 : vector<1x32xf32> to vector<8x32xf32>
    %14 = arith.addf %12, %13 : vector<8x32xf32>
    %cst_11 = arith.constant 0.000000e+00 : f32
    %15 = vector.broadcast %cst_11 : f32 to vector<8x32xf32>
    %16 = arith.maximumf %14, %15 : vector<8x32xf32>
    %c0_12 = arith.constant 0 : index
    %c0_13 = arith.constant 0 : index
    %17 = vector.load %arg6[%c0_12, %c0_13] : memref<32x128xbf16, #tpu.memory_space<vmem>>, vector<32x128xbf16>
    %c0_14 = arith.constant 0 : index
    %c0_15 = arith.constant 0 : index
    %18 = vector.load %arg7[%c0_14, %c0_15] : memref<1x128xf32, #tpu.memory_space<vmem>>, vector<1x128xf32>
    %19 = arith.truncf %16 : vector<8x32xf32> to vector<8x32xbf16>
    %cst_16 = arith.constant dense<0.000000e+00> : vector<8x128xf32>
    %20 = tpu.matmul %19, %17, %cst_16 {dimension_numbers = #tpu.dot_dimension_numbers<[1], [0], [0], [1], [0, 0, 1, 1], [], []>} : vector<8x32xbf16>, vector<32x128xbf16>, vector<8x128xf32> -> vector<8x128xf32>
    %21 = vector.broadcast %18 : vector<1x128xf32> to vector<8x128xf32>
    %22 = arith.addf %20, %21 : vector<8x128xf32>
    %c0_17 = arith.constant 0 : index
    %c0_18 = arith.constant 0 : index
    %23 = vector.load %arg14[%c0_17, %c0_18] : memref<8x128xf32, #tpu.memory_space<vmem>>, vector<8x128xf32>
    tpu.vector_store %arg14[%c0_17, %c0_18], %22 {strides = array<i32>} : memref<8x128xf32, #tpu.memory_space<vmem>>, vector<8x128xf32>,
    %c0_19 = arith.constant 0 : index
    %c0_20 = arith.constant 0 : index
    %24 = vector.load %arg8[%c0_19, %c0_20] : memref<16x32xbf16, #tpu.memory_space<vmem>>, vector<16x32xbf16>
    %c0_21 = arith.constant 0 : index
    %c0_22 = arith.constant 0 : index
    %25 = vector.load %arg9[%c0_21, %c0_22] : memref<1x32xf32, #tpu.memory_space<vmem>>, vector<1x32xf32>
    %26 = arith.truncf %0 : vector<8x16xf32> to vector<8x16xbf16>
    %cst_23 = arith.constant dense<0.000000e+00> : vector<8x32xf32>
    %27 = tpu.matmul %26, %24, %cst_23 {dimension_numbers = #tpu.dot_dimension_numbers<[1], [0], [0], [1], [0, 0, 1, 1], [], []>} : vector<8x16xbf16>, vector<16x32xbf16>, vector<8x32xf32> -> vector<8x32xf32>
    %28 = vector.broadcast %25 : vector<1x32xf32> to vector<8x32xf32>
    %29 = arith.addf %27, %28 : vector<8x32xf32>
    %cst_24 = arith.constant 0.000000e+00 : f32
    %30 = vector.broadcast %cst_24 : f32 to vector<8x32xf32>
    %31 = arith.maximumf %29, %30 : vector<8x32xf32>
    %c0_25 = arith.constant 0 : index
    %c0_26 = arith.constant 0 : index
    %32 = vector.load %arg10[%c0_25, %c0_26] : memref<32x32xbf16, #tpu.memory_space<vmem>>, vector<32x32xbf16>
    %c0_27 = arith.constant 0 : index
    %c0_28 = arith.constant 0 : index
    %33 = vector.load %arg11[%c0_27, %c0_28] : memref<1x32xf32, #tpu.memory_space<vmem>>, vector<1x32xf32>
    %34 = arith.truncf %31 : vector<8x32xf32> to vector<8x32xbf16>
    %cst_29 = arith.constant dense<0.000000e+00> : vector<8x32xf32>
    %35 = tpu.matmul %34, %32, %cst_29 {dimension_numbers = #tpu.dot_dimension_numbers<[1], [0], [0], [1], [0, 0, 1, 1], [], []>} : vector<8x32xbf16>, vector<32x32xbf16>, vector<8x32xf32> -> vector<8x32xf32>
    %36 = vector.broadcast %33 : vector<1x32xf32> to vector<8x32xf32>
    %37 = arith.addf %35, %36 : vector<8x32xf32>
    %cst_30 = arith.constant 0.000000e+00 : f32
    %38 = vector.broadcast %cst_30 : f32 to vector<8x32xf32>
    %39 = arith.maximumf %37, %38 : vector<8x32xf32>
    %c0_31 = arith.constant 0 : index
    %c0_32 = arith.constant 0 : index
    %40 = vector.load %arg12[%c0_31, %c0_32] : memref<32x128xbf16, #tpu.memory_space<vmem>>, vector<32x128xbf16>
    %c0_33 = arith.constant 0 : index
    %c0_34 = arith.constant 0 : index
    %41 = vector.load %arg13[%c0_33, %c0_34] : memref<1x128xf32, #tpu.memory_space<vmem>>, vector<1x128xf32>
    %42 = arith.truncf %39 : vector<8x32xf32> to vector<8x32xbf16>
    %cst_35 = arith.constant dense<0.000000e+00> : vector<8x128xf32>
    %43 = tpu.matmul %42, %40, %cst_35 {dimension_numbers = #tpu.dot_dimension_numbers<[1], [0], [0], [1], [0, 0, 1, 1], [], []>} : vector<8x32xbf16>, vector<32x128xbf16>, vector<8x128xf32> -> vector<8x128xf32>
    %44 = vector.broadcast %41 : vector<1x128xf32> to vector<8x128xf32>
    %45 = arith.addf %43, %44 : vector<8x128xf32>
    %c0_36 = arith.constant 0 : index
    %c0_37 = arith.constant 0 : index
    %46 = vector.load %arg15[%c0_36, %c0_37] : memref<8x128xf32, #tpu.memory_space<vmem>>, vector<8x128xf32>
    tpu.vector_store %arg15[%c0_36, %c0_37], %45 {strides = array<i32>} : memref<8x128xf32, #tpu.memory_space<vmem>>, vector<8x128xf32>,
    return
  }
  func.func @transform_0(%arg0: i32) -> (i32, i32) {
    %c0_i32 = arith.constant 0 : i32
    %c0_i32_0 = arith.constant 0 : i32
    return %arg0, %c0_i32 : i32, i32
  }
  func.func @transform_1(%arg0: i32) -> (i32, i32) {
    %c0_i32 = arith.constant 0 : i32
    %c0_i32_0 = arith.constant 0 : i32
    %c0_i32_1 = arith.constant 0 : i32
    return %c0_i32, %c0_i32_0 : i32, i32
  }
  func.func @transform_2(%arg0: i32) -> (i32, i32) {
    %c0_i32 = arith.constant 0 : i32
    %c0_i32_0 = arith.constant 0 : i32
    %c0_i32_1 = arith.constant 0 : i32
    return %c0_i32, %c0_i32_0 : i32, i32
  }
  func.func @transform_3(%arg0: i32) -> (i32, i32) {
    %c0_i32 = arith.constant 0 : i32
    %c0_i32_0 = arith.constant 0 : i32
    %c0_i32_1 = arith.constant 0 : i32
    return %c0_i32, %c0_i32_0 : i32, i32
  }
  func.func @transform_4(%arg0: i32) -> (i32, i32) {
    %c0_i32 = arith.constant 0 : i32
    %c0_i32_0 = arith.constant 0 : i32
    %c0_i32_1 = arith.constant 0 : i32
    return %c0_i32, %c0_i32_0 : i32, i32
  }
  func.func @transform_5(%arg0: i32) -> (i32, i32) {
    %c0_i32 = arith.constant 0 : i32
    %c0_i32_0 = arith.constant 0 : i32
    %c0_i32_1 = arith.constant 0 : i32
    return %c0_i32, %c0_i32_0 : i32, i32
  }
  func.func @transform_6(%arg0: i32) -> (i32, i32) {
    %c0_i32 = arith.constant 0 : i32
    %c0_i32_0 = arith.constant 0 : i32
    %c0_i32_1 = arith.constant 0 : i32
    return %c0_i32, %c0_i32_0 : i32, i32
  }
  func.func @transform_7(%arg0: i32) -> (i32, i32) {
    %c0_i32 = arith.constant 0 : i32
    %c0_i32_0 = arith.constant 0 : i32
    %c0_i32_1 = arith.constant 0 : i32
    return %c0_i32, %c0_i32_0 : i32, i32
  }
  func.func @transform_8(%arg0: i32) -> (i32, i32) {
    %c0_i32 = arith.constant 0 : i32
    %c0_i32_0 = arith.constant 0 : i32
    %c0_i32_1 = arith.constant 0 : i32
    return %c0_i32, %c0_i32_0 : i32, i32
  }
  func.func @transform_9(%arg0: i32) -> (i32, i32) {
    %c0_i32 = arith.constant 0 : i32
    %c0_i32_0 = arith.constant 0 : i32
    %c0_i32_1 = arith.constant 0 : i32
    return %c0_i32, %c0_i32_0 : i32, i32
  }
  func.func @transform_10(%arg0: i32) -> (i32, i32) {
    %c0_i32 = arith.constant 0 : i32
    %c0_i32_0 = arith.constant 0 : i32
    %c0_i32_1 = arith.constant 0 : i32
    return %c0_i32, %c0_i32_0 : i32, i32
  }
  func.func @transform_11(%arg0: i32) -> (i32, i32) {
    %c0_i32 = arith.constant 0 : i32
    %c0_i32_0 = arith.constant 0 : i32
    %c0_i32_1 = arith.constant 0 : i32
    return %c0_i32, %c0_i32_0 : i32, i32
  }
  func.func @transform_12(%arg0: i32) -> (i32, i32) {
    %c0_i32 = arith.constant 0 : i32
    %c0_i32_0 = arith.constant 0 : i32
    %c0_i32_1 = arith.constant 0 : i32
    return %c0_i32, %c0_i32_0 : i32, i32
  }
  func.func @transform_13(%arg0: i32) -> (i32, i32) {
    %c0_i32 = arith.constant 0 : i32
    %c0_i32_0 = arith.constant 0 : i32
    return %arg0, %c0_i32 : i32, i32
  }
  func.func @transform_14(%arg0: i32) -> (i32, i32) {
    %c0_i32 = arith.constant 0 : i32
    %c0_i32_0 = arith.constant 0 : i32
    return %arg0, %c0_i32 : i32, i32
  }
}

</mosaic_0001>

<llo_original>
// kernel: tpu_custom_call.1
$region0: #{tpu_custom_call.1}
  #allocation0 [shape = 'u32[]', space=smem, size = 0x4, offset = 0x4, fixed_abs, tag = 'smem constant byte address 0x4 - core index']
  #allocation1 [shape = 'u32[144,128]{1,0:T(1,128)}', space=vmem, size = 0x12000, scoped, tag = 'internal scratch']
  %s0 = inlined_call_operand.hbm [shape: f32[8,16], index: 0, kind: input, shape index: {}]
  %s1 = inlined_call_operand.hbm [shape: bf16[16,32], index: 1, kind: input, shape index: {}]
  %s2 = inlined_call_operand.vmem [shape: f32[1,32], index: 2, kind: input, shape index: {}]
  %s3 = inlined_call_operand.hbm [shape: bf16[32,32], index: 3, kind: input, shape index: {}]
  %s4 = inlined_call_operand.vmem [shape: f32[1,32], index: 4, kind: input, shape index: {}]
  %s5 = inlined_call_operand.vmem [shape: bf16[32,128], index: 5, kind: input, shape index: {}]
  %s6 = inlined_call_operand.hbm [shape: f32[1,128], index: 6, kind: input, shape index: {}]
  %s7 = inlined_call_operand.hbm [shape: bf16[16,32], index: 7, kind: input, shape index: {}]
  %s8 = inlined_call_operand.hbm [shape: f32[1,32], index: 8, kind: input, shape index: {}]
  %s9 = inlined_call_operand.vmem [shape: bf16[32,32], index: 9, kind: input, shape index: {}]
  %s10 = inlined_call_operand.vmem [shape: f32[1,32], index: 10, kind: input, shape index: {}]
  %s11 = inlined_call_operand.hbm [shape: bf16[32,128], index: 11, kind: input, shape index: {}]
  %s12 = inlined_call_operand.vmem [shape: f32[1,128], index: 12, kind: input, shape index: {}]
  %s13 = inlined_call_operand.hbm [shape: f32[8,128], index: 13, kind: output, shape index: {0}]
  %s14 = inlined_call_operand.hbm [shape: f32[8,128], index: 14, kind: output, shape index: {1}]
  %15 = xla_tuple %s13, %s14
  %s16 = sld [smem:[#allocation0]]
  $region98: #{tpu_custom_call.1} parent=0
    _
  %s18 = ssub.s32 1, %s16
  %s19 = scalar_select 0, %s18, %s16
  $region1: #{tpu_custom_call.1} parent=0
    #allocation2 [shape = 'u8[4096]{0}', space=vmem, size = 0x1000, scoped, tag = 'input window, operand 0, single buffered']
    #allocation3 [shape = 's32[1]{0}', space=sflag, size = 0x4, scoped, tag = 'scoped memory for tpu_custom_call.1']
    #allocation4 [shape = 's32[1]{0}', space=sflag, size = 0x4, scoped, tag = 'scoped memory for tpu_custom_call.1']
    #allocation5 [shape = 'u8[4096]{0}', space=vmem, size = 0x1000, scoped, tag = 'input window, operand 1, single buffered']
    #allocation6 [shape = 's32[1]{0}', space=sflag, size = 0x4, scoped, tag = 'scoped memory for tpu_custom_call.1']
    #allocation7 [shape = 'u8[8192]{0}', space=vmem, size = 0x2000, scoped, tag = 'input window, operand 3, single buffered']
    #allocation8 [shape = 'u8[512]{0}', space=vmem, size = 0x400, scoped, tag = 'input window, operand 6, single buffered']
    #allocation9 [shape = 's32[1]{0}', space=sflag, size = 0x4, scoped, tag = 'scoped memory for tpu_custom_call.1']
    #allocation10 [shape = 'u8[4096]{0}', space=vmem, size = 0x1000, scoped, tag = 'input window, operand 7, single buffered']
    #allocation11 [shape = 'u8[512]{0}', space=vmem, size = 0x400, scoped, tag = 'input window, operand 8, single buffered']
    #allocation12 [shape = 's32[1]{0}', space=sflag, size = 0x4, scoped, tag = 'scoped memory for tpu_custom_call.1']
    #allocation13 [shape = 'u8[8192]{0}', space=vmem, size = 0x2000, scoped, tag = 'input window, operand 11, single buffered']
    #allocation14 [shape = 'u8[4096]{0}', space=vmem, size = 0x1000, scoped, tag = 'output window, operand 0, single buffered']
    #allocation15 [shape = 'u8[4096]{0}', space=vmem, size = 0x1000, scoped, tag = 'output window, operand 1, single buffered']
    #allocation16 [shape = 's32[1]{0}', space=sflag, size = 0x4, scoped, tag = 'scoped memory for tpu_custom_call.1']
    %20 = vsyncpa [#allocation3], 0
    %21 = vsyncpa [#allocation6], 0
    %22 = vsyncpa [#allocation9], 0
    %23 = vsyncpa [#allocation12], 0
    %24 = vsyncpa [#allocation4], 0
    %25 = vsyncpa [#allocation16], 0
    // Predicated region
    $region2: #{tpu_custom_call.1} parent=1 // pred_check
      _
    $region3: #{tpu_custom_call.1} parent=1 // pred_check_branch
      %27 = sbr.rel (0) target = $region5
    $region4: #{tpu_custom_call.1} parent=1 // pred_region
      %s29 = ssub.s32 128, 128
      %30 = vsyncadd [#allocation3], %s29
      %s32 = sshll.u32 [#allocation2], 4
      %s33 = int_to_ptr.vmem [resolvable:$true] %s32
      %35 = dma.hbm_to_vmem [thread:$0]  %s0, 128, %s33, [#allocation3]
    $region5: #{tpu_custom_call.1} parent=1 // pred_fallthru
      _
    // Predicated region
    $region6: #{tpu_custom_call.1} parent=1 // pred_check
      _
    $region7: #{tpu_custom_call.1} parent=1 // pred_check_branch
      %37 = sbr.rel (0) target = $region9
    $region8: #{tpu_custom_call.1} parent=1 // pred_region
      %s39 = ssub.s32 128, 128
      %40 = vsyncadd [#allocation6], %s39
      %s41 = sshll.u32 [#allocation5], 4
      %s42 = int_to_ptr.vmem [resolvable:$true] %s41
      %47 = dma.hbm_to_vmem [thread:$0]  %s1, 128, %s42, [#allocation6], 64, 64, 4
    $region9: #{tpu_custom_call.1} parent=1 // pred_fallthru
      _
    // Predicated region
    $region10: #{tpu_custom_call.1} parent=1 // pred_check
      _
    $region11: #{tpu_custom_call.1} parent=1 // pred_check_branch
      %49 = sbr.rel (0) target = $region13
    $region12: #{tpu_custom_call.1} parent=1 // pred_region
      _
    $region13: #{tpu_custom_call.1} parent=1 // pred_fallthru
      _
    // Predicated region
    $region14: #{tpu_custom_call.1} parent=1 // pred_check
      _
    $region15: #{tpu_custom_call.1} parent=1 // pred_check_branch
      %51 = sbr.rel (0) target = $region17
    $region16: #{tpu_custom_call.1} parent=1 // pred_region
      %s53 = ssub.s32 256, 256
      %54 = vsyncadd [#allocation6], %s53
      %s55 = sshll.u32 [#allocation7], 4
      %s56 = int_to_ptr.vmem [resolvable:$true] %s55
      %61 = dma.hbm_to_vmem [thread:$0]  %s3, 256, %s56, [#allocation6], 64, 64, 4
    $region17: #{tpu_custom_call.1} parent=1 // pred_fallthru
      _
    // Predicated region
    $region18: #{tpu_custom_call.1} parent=1 // pred_check
      _
    $region19: #{tpu_custom_call.1} parent=1 // pred_check_branch
      %63 = sbr.rel (0) target = $region21
    $region20: #{tpu_custom_call.1} parent=1 // pred_region
      _
    $region21: #{tpu_custom_call.1} parent=1 // pred_fallthru
      _
    // Predicated region
    $region22: #{tpu_custom_call.1} parent=1 // pred_check
      _
    $region23: #{tpu_custom_call.1} parent=1 // pred_check_branch
      %65 = sbr.rel (0) target = $region25
    $region24: #{tpu_custom_call.1} parent=1 // pred_region
      _
    $region25: #{tpu_custom_call.1} parent=1 // pred_fallthru
      _
    // Predicated region
    $region26: #{tpu_custom_call.1} parent=1 // pred_check
      _
    $region27: #{tpu_custom_call.1} parent=1 // pred_check_branch
      %67 = sbr.rel (0) target = $region29
    $region28: #{tpu_custom_call.1} parent=1 // pred_region
      %s69 = ssub.s32 16, 16
      %70 = vsyncadd [#allocation9], %s69
      %s72 = sshll.u32 [#allocation8], 4
      %s73 = int_to_ptr.vmem [resolvable:$true] %s72
      %75 = dma.hbm_to_vmem [thread:$0]  %s6, 16, %s73, [#allocation9]
    $region29: #{tpu_custom_call.1} parent=1 // pred_fallthru
      _
    // Predicated region
    $region30: #{tpu_custom_call.1} parent=1 // pred_check
      _
    $region31: #{tpu_custom_call.1} parent=1 // pred_check_branch
      %77 = sbr.rel (0) target = $region33
    $region32: #{tpu_custom_call.1} parent=1 // pred_region
      %s79 = ssub.s32 128, 128
      %80 = vsyncadd [#allocation9], %s79
      %s81 = sshll.u32 [#allocation10], 4
      %s82 = int_to_ptr.vmem [resolvable:$true] %s81
      %87 = dma.hbm_to_vmem [thread:$0]  %s7, 128, %s82, [#allocation9], 64, 64, 4
    $region33: #{tpu_custom_call.1} parent=1 // pred_fallthru
      _
    // Predicated region
    $region34: #{tpu_custom_call.1} parent=1 // pred_check
      _
    $region35: #{tpu_custom_call.1} parent=1 // pred_check_branch
      %89 = sbr.rel (0) target = $region37
    $region36: #{tpu_custom_call.1} parent=1 // pred_region
      %s91 = ssub.s32 16, 16
      %92 = vsyncadd [#allocation12], %s91
      %s94 = sshll.u32 [#allocation11], 4
      %s95 = int_to_ptr.vmem [resolvable:$true] %s94
      %97 = dma.hbm_to_vmem [thread:$0]  %s8, 16, %s95, [#allocation12]
    $region37: #{tpu_custom_call.1} parent=1 // pred_fallthru
      _
    // Predicated region
    $region38: #{tpu_custom_call.1} parent=1 // pred_check
      _
    $region39: #{tpu_custom_call.1} parent=1 // pred_check_branch
      %99 = sbr.rel (0) target = $region41
    $region40: #{tpu_custom_call.1} parent=1 // pred_region
      _
    $region41: #{tpu_custom_call.1} parent=1 // pred_fallthru
      _
    // Predicated region
    $region42: #{tpu_custom_call.1} parent=1 // pred_check
      _
    $region43: #{tpu_custom_call.1} parent=1 // pred_check_branch
      %101 = sbr.rel (0) target = $region45
    $region44: #{tpu_custom_call.1} parent=1 // pred_region
      _
    $region45: #{tpu_custom_call.1} parent=1 // pred_fallthru
      _
    // Predicated region
    $region46: #{tpu_custom_call.1} parent=1 // pred_check
      _
    $region47: #{tpu_custom_call.1} parent=1 // pred_check_branch
      %103 = sbr.rel (0) target = $region49
    $region48: #{tpu_custom_call.1} parent=1 // pred_region
      %s105 = ssub.s32 256, 256
      %106 = vsyncadd [#allocation12], %s105
      %s107 = sshll.u32 [#allocation13], 4
      %s108 = int_to_ptr.vmem [resolvable:$true] %s107
      %113 = dma.hbm_to_vmem [thread:$0]  %s11, 256, %s108, [#allocation12], 64, 64, 4
    $region49: #{tpu_custom_call.1} parent=1 // pred_fallthru
      _
    // Predicated region
    $region50: #{tpu_custom_call.1} parent=1 // pred_check
      _
    $region51: #{tpu_custom_call.1} parent=1 // pred_check_branch
      %115 = sbr.rel (0) target = $region53
    $region52: #{tpu_custom_call.1} parent=1 // pred_region
      _
    $region53: #{tpu_custom_call.1} parent=1 // pred_fallthru
      _
    // Predicated region
    $region54: #{tpu_custom_call.1} parent=1 // pred_check
      _
    $region55: #{tpu_custom_call.1} parent=1 // pred_check_branch
      %117 = sbr.rel (0) target = $region57
    $region56: #{tpu_custom_call.1} parent=1 // pred_region
      %118 = dma.done [#allocation3], 128
    $region57: #{tpu_custom_call.1} parent=1 // pred_fallthru
      _
    // Predicated region
    $region58: #{tpu_custom_call.1} parent=1 // pred_check
      _
    $region59: #{tpu_custom_call.1} parent=1 // pred_check_branch
      %120 = sbr.rel (0) target = $region61
    $region60: #{tpu_custom_call.1} parent=1 // pred_region
      %121 = dma.done [#allocation6], 128
    $region61: #{tpu_custom_call.1} parent=1 // pred_fallthru
      _
    // Predicated region
    $region62: #{tpu_custom_call.1} parent=1 // pred_check
      _
    $region63: #{tpu_custom_call.1} parent=1 // pred_check_branch
      %123 = sbr.rel (0) target = $region65
    $region64: #{tpu_custom_call.1} parent=1 // pred_region
      %124 = dma.done [#allocation6], 256
    $region65: #{tpu_custom_call.1} parent=1 // pred_fallthru
      _
    // Predicated region
    $region66: #{tpu_custom_call.1} parent=1 // pred_check
      _
    $region67: #{tpu_custom_call.1} parent=1 // pred_check_branch
      %126 = sbr.rel (0) target = $region69
    $region68: #{tpu_custom_call.1} parent=1 // pred_region
      %127 = dma.done [#allocation9], 16
    $region69: #{tpu_custom_call.1} parent=1 // pred_fallthru
      _
    // Predicated region
    $region70: #{tpu_custom_call.1} parent=1 // pred_check
      _
    $region71: #{tpu_custom_call.1} parent=1 // pred_check_branch
      %129 = sbr.rel (0) target = $region73
    $region72: #{tpu_custom_call.1} parent=1 // pred_region
      %130 = dma.done [#allocation9], 128
    $region73: #{tpu_custom_call.1} parent=1 // pred_fallthru
      _
    // Predicated region
    $region74: #{tpu_custom_call.1} parent=1 // pred_check
      _
    $region75: #{tpu_custom_call.1} parent=1 // pred_check_branch
      %132 = sbr.rel (0) target = $region77
    $region76: #{tpu_custom_call.1} parent=1 // pred_region
      %133 = dma.done [#allocation12], 16
    $region77: #{tpu_custom_call.1} parent=1 // pred_fallthru
      _
    // Predicated region
    $region78: #{tpu_custom_call.1} parent=1 // pred_check
      _
    $region79: #{tpu_custom_call.1} parent=1 // pred_check_branch
      %135 = sbr.rel (0) target = $region81
    $region80: #{tpu_custom_call.1} parent=1 // pred_region
      %136 = dma.done [#allocation12], 256
    $region81: #{tpu_custom_call.1} parent=1 // pred_fallthru
      _
    %v138 = vld [vmem:[#allocation2] sm:$0xff]
    %v139 = vld [vmem:[#allocation5] sm:$0xf]
    %v140 = vld [vmem:[#allocation5 + $0x4] sm:$0xf]
    %v141 = vld [vmem:[%s2] sm:$0x1]
    %v142 = vpack.c.bf16 %v138, %v138
    %v144 = vlaneseq
    %v145 = vshrl.u32 %v144, 7
    %v146 = vsub.s32 0, %v145
    %v147 = vrot.slane %v141, %v146
    %v151 = vunpack.c.l.b16 %v139
    %v152 = vunpack.c.l.b16 %v140
    %v153 = vpack.c.b16 %v152, %v151
    %vm155 = vcmask 130048
    %v157 = vsel %vm155, %v142, 0
    %159 = vmatprep.subr.bf16.mxu0 0
    %160 = vmatpush1.bf16.msra.mxu0 %v153
    %161 = vmatprep.subr.bf16.mxu0 0
    %162 = vmatpush1.bf16.msra.mxu0 0
    %163 = vmatprep.subr.bf16.mxu0 0
    %164 = vmatpush1.bf16.msra.mxu0 0
    %165 = vmatprep.subr.bf16.mxu0 0
    %166 = vmatpush1.bf16.msra.mxu0 0
    %167 = vmatprep.subr.bf16.mxu0 0
    %168 = vmatpush1.bf16.msra.mxu0 0
    %169 = vmatprep.subr.bf16.mxu0 0
    %170 = vmatpush1.bf16.msra.mxu0 0
    %171 = vmatprep.subr.bf16.mxu0 0
    %172 = vmatpush1.bf16.msra.mxu0 0
    %173 = vmatprep.subr.bf16.mxu0 0
    %174 = vmatpush1.bf16.msra.mxu0 0
    %175 = vmatprep.subr.bf16.mxu0 0
    %176 = vmatpush1.bf16.msra.mxu0 0
    %177 = vmatprep.subr.bf16.mxu0 0
    %178 = vmatpush1.bf16.msra.mxu0 0
    %179 = vmatprep.subr.bf16.mxu0 0
    %180 = vmatpush1.bf16.msra.mxu0 0
    %181 = vmatprep.subr.bf16.mxu0 0
    %182 = vmatpush1.bf16.msra.mxu0 0
    %183 = vmatprep.subr.bf16.mxu0 0
    %184 = vmatpush1.bf16.msra.mxu0 0
    %185 = vmatprep.subr.bf16.mxu0 0
    %186 = vmatpush1.bf16.msra.mxu0 0
    %187 = vmatprep.subr.bf16.mxu0 0
    %188 = vmatpush1.bf16.msra.mxu0 0
    %189 = vmatprep.subr.bf16.mxu0 0
    %190 = vmatpush1.bf16.msra.mxu0 0
    %191 = vmatprep.mubr.bf16.mxu0 0
    %192 = vmatmul.mubr.bf16.gmra.mrb[0].mxu0 %v157
    %v193 = vpop.f32.mrb[0].mxu0
    %v194 = vadd.f32 %v147, %v193
    %v195 = vpop.f32.mrb[0].mxu0
    %v196 = vpop.f32.mrb[0].mxu0
    %v197 = vpop.f32.mrb[0].mxu0
    %198 = vdwg.mxu0
    %v199 = vmax.f32 %v194, 0.0
    %v200 = vld [vmem:[#allocation7] sm:$0xf]
    %v201 = vld [vmem:[#allocation7 + $0x4] sm:$0xf]
    %v202 = vld [vmem:[#allocation7 + $0x8] sm:$0xf]
    %v203 = vld [vmem:[#allocation7 + $0xc] sm:$0xf]
    %v204 = vld [vmem:[%s4] sm:$0x1]
    %v205 = vpack.c.bf16 %v199, %v199
    %v207 = vlaneseq
    %v208 = vshrl.u32 %v207, 7
    %v209 = vsub.s32 0, %v208
    %v210 = vrot.slane %v204, %v209
    %v216 = vunpack.c.l.b16 %v200
    %v217 = vunpack.c.l.b16 %v201
    %v218 = vunpack.c.l.b16 %v202
    %v219 = vunpack.c.l.b16 %v203
    %v220 = vpack.c.b16 %v217, %v216
    %v221 = vpack.c.b16 %v219, %v218
    %vm224 = vcmask 261120
    %v226 = vsel %vm224, %v205, 0
    %228 = vmatprep.subr.bf16.mxu0 0
    %229 = vmatpush1.bf16.msra.mxu0 %v220
    %230 = vmatprep.subr.bf16.mxu0 0
    %231 = vmatpush1.bf16.msra.mxu0 %v221
    %232 = vmatprep.subr.bf16.mxu0 0
    %233 = vmatpush1.bf16.msra.mxu0 0
    %234 = vmatprep.subr.bf16.mxu0 0
    %235 = vmatpush1.bf16.msra.mxu0 0
    %236 = vmatprep.subr.bf16.mxu0 0
    %237 = vmatpush1.bf16.msra.mxu0 0
    %238 = vmatprep.subr.bf16.mxu0 0
    %239 = vmatpush1.bf16.msra.mxu0 0
    %240 = vmatprep.subr.bf16.mxu0 0
    %241 = vmatpush1.bf16.msra.mxu0 0
    %242 = vmatprep.subr.bf16.mxu0 0
    %243 = vmatpush1.bf16.msra.mxu0 0
    %244 = vmatprep.subr.bf16.mxu0 0
    %245 = vmatpush1.bf16.msra.mxu0 0
    %246 = vmatprep.subr.bf16.mxu0 0
    %247 = vmatpush1.bf16.msra.mxu0 0
    %248 = vmatprep.subr.bf16.mxu0 0
    %249 = vmatpush1.bf16.msra.mxu0 0
    %250 = vmatprep.subr.bf16.mxu0 0
    %251 = vmatpush1.bf16.msra.mxu0 0
    %252 = vmatprep.subr.bf16.mxu0 0
    %253 = vmatpush1.bf16.msra.mxu0 0
    %254 = vmatprep.subr.bf16.mxu0 0
    %255 = vmatpush1.bf16.msra.mxu0 0
    %256 = vmatprep.subr.bf16.mxu0 0
    %257 = vmatpush1.bf16.msra.mxu0 0
    %258 = vmatprep.subr.bf16.mxu0 0
    %259 = vmatpush1.bf16.msra.mxu0 0
    %260 = vmatprep.mubr.bf16.mxu0 0
    %261 = vmatmul.mubr.bf16.gmra.mrb[0].mxu0 %v226
    %v262 = vpop.f32.mrb[0].mxu0
    %v263 = vadd.f32 %v210, %v262
    %v264 = vpop.f32.mrb[0].mxu0
    %v265 = vpop.f32.mrb[0].mxu0
    %v266 = vpop.f32.mrb[0].mxu0
    %267 = vdwg.mxu0
    %v268 = vmax.f32 %v263, 0.0
    %v269 = vld [vmem:[%s5] sm:$0xf]
    %v270 = vld [vmem:[%s5 + $0x4] sm:$0xf]
    %v271 = vld [vmem:[%s5 + $0x8] sm:$0xf]
    %v272 = vld [vmem:[%s5 + $0xc] sm:$0xf]
    %v273 = vld [vmem:[#allocation8] sm:$0x1]
    %v274 = vpack.c.bf16 %v268, %v268
    %v276 = vlaneseq
    %v277 = vshrl.u32 %v276, 7
    %v278 = vsub.s32 0, %v277
    %v279 = vrot.slane %v273, %v278
    %v285 = vunpack.c.l.b16 %v269
    %v286 = vunpack.c.l.b16 %v270
    %v287 = vunpack.c.l.b16 %v271
    %v288 = vunpack.c.l.b16 %v272
    %v289 = vpack.c.b16 %v286, %v285
    %v290 = vpack.c.b16 %v288, %v287
    %v294 = vsel %vm224, %v274, 0
    %296 = vmatprep.subr.bf16.mxu0 0
    %297 = vmatpush1.bf16.msra.mxu0 %v289
    %298 = vmatprep.subr.bf16.mxu0 0
    %299 = vmatpush1.bf16.msra.mxu0 %v290
    %300 = vmatprep.subr.bf16.mxu0 0
    %301 = vmatpush1.bf16.msra.mxu0 0
    %302 = vmatprep.subr.bf16.mxu0 0
    %303 = vmatpush1.bf16.msra.mxu0 0
    %304 = vmatprep.subr.bf16.mxu0 0
    %305 = vmatpush1.bf16.msra.mxu0 0
    %306 = vmatprep.subr.bf16.mxu0 0
    %307 = vmatpush1.bf16.msra.mxu0 0
    %308 = vmatprep.subr.bf16.mxu0 0
    %309 = vmatpush1.bf16.msra.mxu0 0
    %310 = vmatprep.subr.bf16.mxu0 0
    %311 = vmatpush1.bf16.msra.mxu0 0
    %312 = vmatprep.subr.bf16.mxu0 0
    %313 = vmatpush1.bf16.msra.mxu0 0
    %314 = vmatprep.subr.bf16.mxu0 0
    %315 = vmatpush1.bf16.msra.mxu0 0
    %316 = vmatprep.subr.bf16.mxu0 0
    %317 = vmatpush1.bf16.msra.mxu0 0
    %318 = vmatprep.subr.bf16.mxu0 0
    %319 = vmatpush1.bf16.msra.mxu0 0
    %320 = vmatprep.subr.bf16.mxu0 0
    %321 = vmatpush1.bf16.msra.mxu0 0
    %322 = vmatprep.subr.bf16.mxu0 0
    %323 = vmatpush1.bf16.msra.mxu0 0
    %324 = vmatprep.subr.bf16.mxu0 0
    %325 = vmatpush1.bf16.msra.mxu0 0
    %326 = vmatprep.subr.bf16.mxu0 0
    %327 = vmatpush1.bf16.msra.mxu0 0
    %328 = vmatprep.mubr.bf16.mxu0 0
    %329 = vmatmul.mubr.bf16.gmra.mrb[0].mxu0 %v294
    %v330 = vpop.f32.mrb[0].mxu0
    %v331 = vadd.f32 %v279, %v330
    %v332 = vpop.f32.mrb[0].mxu0
    %v333 = vpop.f32.mrb[0].mxu0
    %v334 = vpop.f32.mrb[0].mxu0
    %335 = vdwg.mxu0
    %336 = vst [vmem:[#allocation14] sm:$0xff] %v331
    %v337 = vld [vmem:[#allocation10] sm:$0xf]
    %v338 = vld [vmem:[#allocation10 + $0x4] sm:$0xf]
    %v339 = vld [vmem:[#allocation11] sm:$0x1]
    %v341 = vlaneseq
    %v342 = vshrl.u32 %v341, 7
    %v343 = vsub.s32 0, %v342
    %v344 = vrot.slane %v339, %v343
    %v348 = vunpack.c.l.b16 %v337
    %v349 = vunpack.c.l.b16 %v338
    %v350 = vpack.c.b16 %v349, %v348
    %352 = vmatprep.subr.bf16.mxu0 0
    %353 = vmatpush1.bf16.msra.mxu0 %v350
    %354 = vmatprep.subr.bf16.mxu0 0
    %355 = vmatpush1.bf16.msra.mxu0 0
    %356 = vmatprep.subr.bf16.mxu0 0
    %357 = vmatpush1.bf16.msra.mxu0 0
    %358 = vmatprep.subr.bf16.mxu0 0
    %359 = vmatpush1.bf16.msra.mxu0 0
    %360 = vmatprep.subr.bf16.mxu0 0
    %361 = vmatpush1.bf16.msra.mxu0 0
    %362 = vmatprep.subr.bf16.mxu0 0
    %363 = vmatpush1.bf16.msra.mxu0 0
    %364 = vmatprep.subr.bf16.mxu0 0
    %365 = vmatpush1.bf16.msra.mxu0 0
    %366 = vmatprep.subr.bf16.mxu0 0
    %367 = vmatpush1.bf16.msra.mxu0 0
    %368 = vmatprep.subr.bf16.mxu0 0
    %369 = vmatpush1.bf16.msra.mxu0 0
    %370 = vmatprep.subr.bf16.mxu0 0
    %371 = vmatpush1.bf16.msra.mxu0 0
    %372 = vmatprep.subr.bf16.mxu0 0
    %373 = vmatpush1.bf16.msra.mxu0 0
    %374 = vmatprep.subr.bf16.mxu0 0
    %375 = vmatpush1.bf16.msra.mxu0 0
    %376 = vmatprep.subr.bf16.mxu0 0
    %377 = vmatpush1.bf16.msra.mxu0 0
    %378 = vmatprep.subr.bf16.mxu0 0
    %379 = vmatpush1.bf16.msra.mxu0 0
    %380 = vmatprep.subr.bf16.mxu0 0
    %381 = vmatpush1.bf16.msra.mxu0 0
    %382 = vmatprep.subr.bf16.mxu0 0
    %383 = vmatpush1.bf16.msra.mxu0 0
    %384 = vmatprep.mubr.bf16.mxu0 0
    %385 = vmatmul.mubr.bf16.gmra.mrb[0].mxu0 %v157
    %v386 = vpop.f32.mrb[0].mxu0
    %v387 = vadd.f32 %v344, %v386
    %v388 = vpop.f32.mrb[0].mxu0
    %v389 = vpop.f32.mrb[0].mxu0
    %v390 = vpop.f32.mrb[0].mxu0
    %391 = vdwg.mxu0
    %v392 = vmax.f32 %v387, 0.0
    %v393 = vld [vmem:[%s9] sm:$0xf]
    %v394 = vld [vmem:[%s9 + $0x4] sm:$0xf]
    %v395 = vld [vmem:[%s9 + $0x8] sm:$0xf]
    %v396 = vld [vmem:[%s9 + $0xc] sm:$0xf]
    %v397 = vld [vmem:[%s10] sm:$0x1]
    %v398 = vpack.c.bf16 %v392, %v392
    %v400 = vlaneseq
    %v401 = vshrl.u32 %v400, 7
    %v402 = vsub.s32 0, %v401
    %v403 = vrot.slane %v397, %v402
    %v409 = vunpack.c.l.b16 %v393
    %v410 = vunpack.c.l.b16 %v394
    %v411 = vunpack.c.l.b16 %v395
    %v412 = vunpack.c.l.b16 %v396
    %v413 = vpack.c.b16 %v410, %v409
    %v414 = vpack.c.b16 %v412, %v411
    %v418 = vsel %vm224, %v398, 0
    %420 = vmatprep.subr.bf16.mxu0 0
    %421 = vmatpush1.bf16.msra.mxu0 %v413
    %422 = vmatprep.subr.bf16.mxu0 0
    %423 = vmatpush1.bf16.msra.mxu0 %v414
    %424 = vmatprep.subr.bf16.mxu0 0
    %425 = vmatpush1.bf16.msra.mxu0 0
    %426 = vmatprep.subr.bf16.mxu0 0
    %427 = vmatpush1.bf16.msra.mxu0 0
    %428 = vmatprep.subr.bf16.mxu0 0
    %429 = vmatpush1.bf16.msra.mxu0 0
    %430 = vmatprep.subr.bf16.mxu0 0
    %431 = vmatpush1.bf16.msra.mxu0 0
    %432 = vmatprep.subr.bf16.mxu0 0
    %433 = vmatpush1.bf16.msra.mxu0 0
    %434 = vmatprep.subr.bf16.mxu0 0
    %435 = vmatpush1.bf16.msra.mxu0 0
    %436 = vmatprep.subr.bf16.mxu0 0
    %437 = vmatpush1.bf16.msra.mxu0 0
    %438 = vmatprep.subr.bf16.mxu0 0
    %439 = vmatpush1.bf16.msra.mxu0 0
    %440 = vmatprep.subr.bf16.mxu0 0
    %441 = vmatpush1.bf16.msra.mxu0 0
    %442 = vmatprep.subr.bf16.mxu0 0
    %443 = vmatpush1.bf16.msra.mxu0 0
    %444 = vmatprep.subr.bf16.mxu0 0
    %445 = vmatpush1.bf16.msra.mxu0 0
    %446 = vmatprep.subr.bf16.mxu0 0
    %447 = vmatpush1.bf16.msra.mxu0 0
    %448 = vmatprep.subr.bf16.mxu0 0
    %449 = vmatpush1.bf16.msra.mxu0 0
    %450 = vmatprep.subr.bf16.mxu0 0
    %451 = vmatpush1.bf16.msra.mxu0 0
    %452 = vmatprep.mubr.bf16.mxu0 0
    %453 = vmatmul.mubr.bf16.gmra.mrb[0].mxu0 %v418
    %v454 = vpop.f32.mrb[0].mxu0
    %v455 = vadd.f32 %v403, %v454
    %v456 = vpop.f32.mrb[0].mxu0
    %v457 = vpop.f32.mrb[0].mxu0
    %v458 = vpop.f32.mrb[0].mxu0
    %459 = vdwg.mxu0
    %v460 = vmax.f32 %v455, 0.0
    %v461 = vld [vmem:[#allocation13] sm:$0xf]
    %v462 = vld [vmem:[#allocation13 + $0x4] sm:$0xf]
    %v463 = vld [vmem:[#allocation13 + $0x8] sm:$0xf]
    %v464 = vld [vmem:[#allocation13 + $0xc] sm:$0xf]
    %v465 = vld [vmem:[%s12] sm:$0x1]
    %v466 = vpack.c.bf16 %v460, %v460
    %v468 = vlaneseq
    %v469 = vshrl.u32 %v468, 7
    %v470 = vsub.s32 0, %v469
    %v471 = vrot.slane %v465, %v470
    %v477 = vunpack.c.l.b16 %v461
    %v478 = vunpack.c.l.b16 %v462
    %v479 = vunpack.c.l.b16 %v463
    %v480 = vunpack.c.l.b16 %v464
    %v481 = vpack.c.b16 %v478, %v477
    %v482 = vpack.c.b16 %v480, %v479
    %v486 = vsel %vm224, %v466, 0
    %488 = vmatprep.subr.bf16.mxu0 0
    %489 = vmatpush1.bf16.msra.mxu0 %v481
    %490 = vmatprep.subr.bf16.mxu0 0
    %491 = vmatpush1.bf16.msra.mxu0 %v482
    %492 = vmatprep.subr.bf16.mxu0 0
    %493 = vmatpush1.bf16.msra.mxu0 0
    %494 = vmatprep.subr.bf16.mxu0 0
    %495 = vmatpush1.bf16.msra.mxu0 0
    %496 = vmatprep.subr.bf16.mxu0 0
    %497 = vmatpush1.bf16.msra.mxu0 0
    %498 = vmatprep.subr.bf16.mxu0 0
    %499 = vmatpush1.bf16.msra.mxu0 0
    %500 = vmatprep.subr.bf16.mxu0 0
    %501 = vmatpush1.bf16.msra.mxu0 0
    %502 = vmatprep.subr.bf16.mxu0 0
    %503 = vmatpush1.bf16.msra.mxu0 0
    %504 = vmatprep.subr.bf16.mxu0 0
    %505 = vmatpush1.bf16.msra.mxu0 0
    %506 = vmatprep.subr.bf16.mxu0 0
    %507 = vmatpush1.bf16.msra.mxu0 0
    %508 = vmatprep.subr.bf16.mxu0 0
    %509 = vmatpush1.bf16.msra.mxu0 0
    %510 = vmatprep.subr.bf16.mxu0 0
    %511 = vmatpush1.bf16.msra.mxu0 0
    %512 = vmatprep.subr.bf16.mxu0 0
    %513 = vmatpush1.bf16.msra.mxu0 0
    %514 = vmatprep.subr.bf16.mxu0 0
    %515 = vmatpush1.bf16.msra.mxu0 0
    %516 = vmatprep.subr.bf16.mxu0 0
    %517 = vmatpush1.bf16.msra.mxu0 0
    %518 = vmatprep.subr.bf16.mxu0 0
    %519 = vmatpush1.bf16.msra.mxu0 0
    %520 = vmatprep.mubr.bf16.mxu0 0
    %521 = vmatmul.mubr.bf16.gmra.mrb[0].mxu0 %v486
    %v522 = vpop.f32.mrb[0].mxu0
    %v523 = vadd.f32 %v471, %v522
    %v524 = vpop.f32.mrb[0].mxu0
    %v525 = vpop.f32.mrb[0].mxu0
    %v526 = vpop.f32.mrb[0].mxu0
    %527 = vdwg.mxu0
    %528 = vst [vmem:[#allocation15] sm:$0xff] %v523
    // Predicated region
    $region82: #{tpu_custom_call.1} parent=1 // pred_check
      _
    $region83: #{tpu_custom_call.1} parent=1 // pred_check_branch
      %530 = sbr.rel (0) target = $region85
    $region84: #{tpu_custom_call.1} parent=1 // pred_region
      %s532 = ssub.s32 128, 128
      %533 = vsyncadd [#allocation4], %s532
      %s535 = sshll.u32 [#allocation14], 4
      %s536 = int_to_ptr.vmem [resolvable:$true] %s535
      %538 = dma.vmem_to_hbm [thread:$0]  %s536, 128, %s13, [#allocation4]
    $region85: #{tpu_custom_call.1} parent=1 // pred_fallthru
      _
    // Predicated region
    $region86: #{tpu_custom_call.1} parent=1 // pred_check
      _
    $region87: #{tpu_custom_call.1} parent=1 // pred_check_branch
      %540 = sbr.rel (0) target = $region89
    $region88: #{tpu_custom_call.1} parent=1 // pred_region
      %s542 = ssub.s32 128, 128
      %543 = vsyncadd [#allocation16], %s542
      %s545 = sshll.u32 [#allocation15], 4
      %s546 = int_to_ptr.vmem [resolvable:$true] %s545
      %548 = dma.vmem_to_hbm [thread:$0]  %s546, 128, %s14, [#allocation16]
    $region89: #{tpu_custom_call.1} parent=1 // pred_fallthru
      _
    // Predicated region
    $region90: #{tpu_custom_call.1} parent=1 // pred_check
      _
    $region91: #{tpu_custom_call.1} parent=1 // pred_check_branch
      %550 = sbr.rel (0) target = $region93
    $region92: #{tpu_custom_call.1} parent=1 // pred_region
      %551 = dma.done [#allocation4], 128
    $region93: #{tpu_custom_call.1} parent=1 // pred_fallthru
      _
    // Predicated region
    $region94: #{tpu_custom_call.1} parent=1 // pred_check
      _
    $region95: #{tpu_custom_call.1} parent=1 // pred_check_branch
      %553 = sbr.rel (0) target = $region97
    $region96: #{tpu_custom_call.1} parent=1 // pred_region
      %554 = dma.done [#allocation16], 128
    $region97: #{tpu_custom_call.1} parent=1 // pred_fallthru
      _
    %555 = vsyncpa [#allocation3], 1
    %556 = vsyncpa [#allocation6], 1
    %557 = vsyncpa [#allocation9], 1
    %558 = vsyncpa [#allocation12], 1
    %559 = vsyncpa [#allocation4], 1
    %560 = vsyncpa [#allocation16], 1

</llo_original>
